<compile_context>
chip_gen: v7x
topology: tpu7x:2x2x1
jax: 0.10.0
libtpu: 0.0.40
codegen_flags: <defaults>
</compile_context>

<pallas_src>
import jax
import jax.numpy as jnp
import numpy as np
from jax import lax
from jax.experimental import pallas as pl
from jax.experimental.pallas import tpu as pltpu


def _round_up(x, m):
    return ((x + m - 1) // m) * m


def _critic_kernel(x_ref, w1_ref, b1_ref, w2_ref, b2_ref, w3_ref, b3_ref, o_ref):
    """One batch tile.  Batch sits on lanes for every intermediate so the final
    store is lane-dense and the value head avoids an N=1 MXU matmul."""
    x = x_ref[...]                                          # (TB, obs_dim)

    # h1^T = tanh(W1 @ x^T + b1)  — q@k^T-style dot_general (contract feature dims),
    # result is (H, TB) with batch on lanes; no explicit transpose materialized.
    h1t = jnp.tanh(
        lax.dot_general(w1_ref[...], x, (((1,), (1,)), ((), ())),
                        preferred_element_type=jnp.float32)
        + b1_ref[...])                                      # (H, TB)

    # h2^T = tanh(W2 @ h1^T + b2)
    h2t = jnp.tanh(
        jnp.dot(w2_ref[...], h1t, preferred_element_type=jnp.float32)
        + b2_ref[...])                                      # (H, TB)

    # Linear(H -> 1): VPU multiply against the w3 column + sublane (XLU) reduce.
    v = jnp.sum(w3_ref[...] * h2t, axis=0, keepdims=True) + b3_ref[...]   # (1, TB)
    o_ref[...] = v.astype(o_ref.dtype)


def critic_forward(obs, w1, b1, w2, b2, w3, b3, *, tile_b=4096):
    """Critic MLP forward.  Params in PyTorch layout: w=(out,in), b=(out,)."""
    obs = obs.astype(jnp.float32)
    batch, obs_dim = obs.shape
    hidden = w1.shape[0]

    # Pick the batch tile: single full (sublane-aligned) tile for small batches,
    # otherwise a lane-aligned tile (multiple of 128) so the lane-dense output
    # block satisfies layout constraints.
    batch8 = _round_up(batch, 8)
    if batch8 <= tile_b:
        tb = batch8
    else:
        tb = _round_up(tile_b, 128)
    padded = _round_up(batch, tb)
    n_tiles = padded // tb
    if padded != batch:
        obs = jnp.pad(obs, ((0, padded - batch), (0, 0)))

    # Reshape params for the lane-major (batch-on-lanes) kernel orientation.
    b1c = b1.reshape(hidden, 1).astype(jnp.float32)
    b2c = b2.reshape(hidden, 1).astype(jnp.float32)
    w3c = w3.reshape(hidden, 1).astype(jnp.float32)   # (1, H) -> (H, 1)
    b3c = b3.reshape(1, 1).astype(jnp.float32)

    resident = lambda shape: pl.BlockSpec(shape, lambda i: (0, 0))  # VMEM-resident

    out = pl.pallas_call(
        _critic_kernel,
        out_shape=jax.ShapeDtypeStruct((1, padded), jnp.float32),
        grid=(n_tiles,),
        in_specs=[
            pl.BlockSpec((tb, obs_dim), lambda i: (i, 0)),   # obs tile (pipelined)
            resident((hidden, obs_dim)),                     # W1
            resident((hidden, 1)),                           # b1
            resident((hidden, hidden)),                      # W2
            resident((hidden, 1)),                           # b2
            resident((hidden, 1)),                           # w3 column
            resident((1, 1)),                                # b3
        ],
        out_specs=pl.BlockSpec((1, tb), lambda i: (0, i)),   # lane-dense value slab
        compiler_params=pltpu.CompilerParams(
            dimension_semantics=("parallel",)),
    )(obs, w1.astype(jnp.float32), b1c, w2.astype(jnp.float32), b2c, w3c, b3c)

    return out[0, :batch].reshape(batch, 1)


def critic_reference(obs, w1, b1, w2, b2, w3, b3):
    """Pure-JAX reference identical to the PyTorch module semantics."""
    h = jnp.tanh(obs @ w1.T + b1)
    h = jnp.tanh(h @ w2.T + b2)
    return h @ w3.T + b3


def init_critic_params(key, obs_dim, hidden_dim):
    """Deterministic PyTorch-nn.Linear-style uniform init, weights (out, in)."""
    ks = jax.random.split(key, 6)

    def linear(kw, kb, fan_in, fan_out):
        bound = 1.0 / np.sqrt(fan_in)
        w = jax.random.uniform(kw, (fan_out, fan_in), jnp.float32, -bound, bound)
        b = jax.random.uniform(kb, (fan_out,), jnp.float32, -bound, bound)
        return w, b

    w1, b1 = linear(ks[0], ks[1], obs_dim, hidden_dim)
    w2, b2 = linear(ks[2], ks[3], hidden_dim, hidden_dim)
    w3, b3 = linear(ks[4], ks[5], hidden_dim, 1)
    return w1, b1, w2, b2, w3, b3


if __name__ == "__main__":
    obs_dim, hidden_dim = 16, 32

    key = jax.random.PRNGKey(0)
    k_obs, k_par, k_obs2 = jax.random.split(key, 3)
    params = init_critic_params(k_par, obs_dim, hidden_dim)

    # Small rollout-sized batch (single-tile path).
    obs = jax.random.normal(k_obs, (8, obs_dim), dtype=jnp.float32)
    value = jax.block_until_ready(critic_forward(obs, *params))
    ref = critic_reference(obs, *params)
    np.testing.assert_allclose(np.asarray(value), np.asarray(ref), rtol=1e-4, atol=1e-4)
    assert value.shape == (8, 1) and value.dtype == jnp.float32

    # Non-tile-multiple batch: exercises the batch grid, padding, and the
    # pipelined lane-dense output path (3 tiles of 128 rows).
    obs2 = jax.random.normal(k_obs2, (300, obs_dim), dtype=jnp.float32)
    value2 = jax.block_until_ready(critic_forward(obs2, *params, tile_b=128))
    ref2 = critic_reference(obs2, *params)
    np.testing.assert_allclose(np.asarray(value2), np.asarray(ref2), rtol=1e-4, atol=1e-4)
    assert value2.shape == (300, 1) and value2.dtype == jnp.float32

    print("KERNEL_OK")
</pallas_src>

<mosaic_0001>
module attributes {stable_mosaic.version = 11 : i64} {
  func.func @_critic_kernel(%arg0: i32, %arg1: memref<8x16xf32, #tpu.memory_space<vmem>>, %arg2: memref<32x16xf32, #tpu.memory_space<vmem>>, %arg3: memref<32x1xf32, #tpu.memory_space<vmem>>, %arg4: memref<32x32xf32, #tpu.memory_space<vmem>>, %arg5: memref<32x1xf32, #tpu.memory_space<vmem>>, %arg6: memref<32x1xf32, #tpu.memory_space<vmem>>, %arg7: memref<1x1xf32, #tpu.memory_space<vmem>>, %arg8: memref<1x8xf32, #tpu.memory_space<vmem>>) attributes {dimension_semantics = [#tpu.dimension_semantics<parallel>], iteration_bounds = array<i64: 1>, scalar_prefetch = 0 : i64, scratch_operands = 0 : i64, tpu.core_type = #tpu.core_type<tc>, window_params = [{transform_indices = @transform_0, window_bounds = array<i64: 8, 16>}, {pipeline_mode = #tpu.pipeline_mode<synchronous>, transform_indices = @transform_1, window_bounds = array<i64: 32, 16>}, {pipeline_mode = #tpu.pipeline_mode<synchronous>, transform_indices = @transform_2, window_bounds = array<i64: 32, 1>}, {pipeline_mode = #tpu.pipeline_mode<synchronous>, transform_indices = @transform_3, window_bounds = array<i64: 32, 32>}, {pipeline_mode = #tpu.pipeline_mode<synchronous>, transform_indices = @transform_4, window_bounds = array<i64: 32, 1>}, {pipeline_mode = #tpu.pipeline_mode<synchronous>, transform_indices = @transform_5, window_bounds = array<i64: 32, 1>}, {pipeline_mode = #tpu.pipeline_mode<synchronous>, transform_indices = @transform_6, window_bounds = array<i64: 1, 1>}, {transform_indices = @transform_7, window_bounds = array<i64: 1, 8>}]} {
    %c0 = arith.constant 0 : index
    %c0_0 = arith.constant 0 : index
    %0 = vector.load %arg1[%c0, %c0_0] : memref<8x16xf32, #tpu.memory_space<vmem>>, vector<8x16xf32>
    %c0_1 = arith.constant 0 : index
    %c0_2 = arith.constant 0 : index
    %1 = vector.load %arg2[%c0_1, %c0_2] : memref<32x16xf32, #tpu.memory_space<vmem>>, vector<32x16xf32>
    %cst = arith.constant dense<0.000000e+00> : vector<32x8xf32>
    %2 = tpu.matmul %1, %0, %cst {dimension_numbers = #tpu.dot_dimension_numbers<[1], [1], [0], [0], [0, 0, 1, 0], [], []>} : vector<32x16xf32>, vector<8x16xf32>, vector<32x8xf32> -> vector<32x8xf32>
    %c0_3 = arith.constant 0 : index
    %c0_4 = arith.constant 0 : index
    %3 = vector.load %arg3[%c0_3, %c0_4] : memref<32x1xf32, #tpu.memory_space<vmem>>, vector<32x1xf32>
    %4 = vector.broadcast %3 : vector<32x1xf32> to vector<32x8xf32>
    %5 = arith.addf %2, %4 : vector<32x8xf32>
    %6 = math.tanh %5 : vector<32x8xf32>
    %c0_5 = arith.constant 0 : index
    %c0_6 = arith.constant 0 : index
    %7 = vector.load %arg4[%c0_5, %c0_6] : memref<32x32xf32, #tpu.memory_space<vmem>>, vector<32x32xf32>
    %cst_7 = arith.constant dense<0.000000e+00> : vector<32x8xf32>
    %8 = tpu.matmul %7, %6, %cst_7 {dimension_numbers = #tpu.dot_dimension_numbers<[1], [0], [0], [1], [0, 0, 1, 1], [], []>} : vector<32x32xf32>, vector<32x8xf32>, vector<32x8xf32> -> vector<32x8xf32>
    %c0_8 = arith.constant 0 : index
    %c0_9 = arith.constant 0 : index
    %9 = vector.load %arg5[%c0_8, %c0_9] : memref<32x1xf32, #tpu.memory_space<vmem>>, vector<32x1xf32>
    %10 = vector.broadcast %9 : vector<32x1xf32> to vector<32x8xf32>
    %11 = arith.addf %8, %10 : vector<32x8xf32>
    %12 = math.tanh %11 : vector<32x8xf32>
    %c0_10 = arith.constant 0 : index
    %c0_11 = arith.constant 0 : index
    %13 = vector.load %arg6[%c0_10, %c0_11] : memref<32x1xf32, #tpu.memory_space<vmem>>, vector<32x1xf32>
    %14 = vector.broadcast %13 : vector<32x1xf32> to vector<32x8xf32>
    %15 = arith.mulf %14, %12 : vector<32x8xf32>
    %cst_12 = arith.constant dense<0.000000e+00> : vector<8xf32>
    %16 = vector.multi_reduction <add>, %15, %cst_12 [0] : vector<32x8xf32> to vector<8xf32>
    %17 = vector.shape_cast %16 : vector<8xf32> to vector<1x8xf32>
    %c0_13 = arith.constant 0 : index
    %c0_14 = arith.constant 0 : index
    %18 = vector.load %arg7[%c0_13, %c0_14] : memref<1x1xf32, #tpu.memory_space<vmem>>, vector<1x1xf32>
    %19 = vector.broadcast %18 : vector<1x1xf32> to vector<1x8xf32>
    %20 = arith.addf %17, %19 : vector<1x8xf32>
    %c0_15 = arith.constant 0 : index
    %c0_16 = arith.constant 0 : index
    %21 = vector.load %arg8[%c0_15, %c0_16] : memref<1x8xf32, #tpu.memory_space<vmem>>, vector<1x8xf32>
    tpu.vector_store %arg8[%c0_15, %c0_16], %20 {strides = array<i32>} : memref<1x8xf32, #tpu.memory_space<vmem>>, vector<1x8xf32>,
    return
  }
  func.func @transform_0(%arg0: i32) -> (i32, i32) {
    %c0_i32 = arith.constant 0 : i32
    %c0_i32_0 = arith.constant 0 : i32
    return %arg0, %c0_i32 : i32, i32
  }
  func.func @transform_1(%arg0: i32) -> (i32, i32) {
    %c0_i32 = arith.constant 0 : i32
    %c0_i32_0 = arith.constant 0 : i32
    %c0_i32_1 = arith.constant 0 : i32
    return %c0_i32, %c0_i32_0 : i32, i32
  }
  func.func @transform_2(%arg0: i32) -> (i32, i32) {
    %c0_i32 = arith.constant 0 : i32
    %c0_i32_0 = arith.constant 0 : i32
    %c0_i32_1 = arith.constant 0 : i32
    return %c0_i32, %c0_i32_0 : i32, i32
  }
  func.func @transform_3(%arg0: i32) -> (i32, i32) {
    %c0_i32 = arith.constant 0 : i32
    %c0_i32_0 = arith.constant 0 : i32
    %c0_i32_1 = arith.constant 0 : i32
    return %c0_i32, %c0_i32_0 : i32, i32
  }
  func.func @transform_4(%arg0: i32) -> (i32, i32) {
    %c0_i32 = arith.constant 0 : i32
    %c0_i32_0 = arith.constant 0 : i32
    %c0_i32_1 = arith.constant 0 : i32
    return %c0_i32, %c0_i32_0 : i32, i32
  }
  func.func @transform_5(%arg0: i32) -> (i32, i32) {
    %c0_i32 = arith.constant 0 : i32
    %c0_i32_0 = arith.constant 0 : i32
    %c0_i32_1 = arith.constant 0 : i32
    return %c0_i32, %c0_i32_0 : i32, i32
  }
  func.func @transform_6(%arg0: i32) -> (i32, i32) {
    %c0_i32 = arith.constant 0 : i32
    %c0_i32_0 = arith.constant 0 : i32
    %c0_i32_1 = arith.constant 0 : i32
    return %c0_i32, %c0_i32_0 : i32, i32
  }
  func.func @transform_7(%arg0: i32) -> (i32, i32) {
    %c0_i32 = arith.constant 0 : i32
    %c0_i32_0 = arith.constant 0 : i32
    return %c0_i32, %arg0 : i32, i32
  }
}

</mosaic_0001>

<llo_original>
// kernel: tpu_custom_call.1
$region0: #{tpu_custom_call.1}
  #allocation0 [shape = 'u32[]', space=smem, size = 0x4, offset = 0x4, fixed_abs, tag = 'smem constant byte address 0x4 - core index']
  #allocation1 [shape = 'u32[144,128]{1,0:T(1,128)}', space=vmem, size = 0x12000, scoped, tag = 'internal scratch']
  #allocation2 [shape = 'f32[1,1]{1,0:T(1,128)S(1)}', space=vmem, size = 0x200, scoped, tag = 'scoped memory for tpu_custom_call.1']
  %s0 = inlined_call_operand.vmem [shape: f32[8,16], index: 0, kind: input, shape index: {}]
  %s1 = inlined_call_operand.vmem [shape: f32[32,16], index: 1, kind: input, shape index: {}]
  %s2 = inlined_call_operand.vmem [shape: f32[32,1], index: 2, kind: input, shape index: {}]
  %s3 = inlined_call_operand.vmem [shape: f32[32,32], index: 3, kind: input, shape index: {}]
  %s4 = inlined_call_operand.vmem [shape: f32[32,1], index: 4, kind: input, shape index: {}]
  %s5 = inlined_call_operand.vmem [shape: f32[32,1], index: 5, kind: input, shape index: {}]
  %s6 = inlined_call_operand.<no memory space> [shape: f32[1,1], index: 6, kind: input, shape index: {}]
  %s7 = inlined_call_operand.hbm [shape: f32[1,8], index: 7, kind: output, shape index: {}]
  %s8 = sld [smem:[#allocation0]]
  $region38: #{tpu_custom_call.1} parent=0
    _
  %s10 = ssub.s32 1, %s8
  %s11 = scalar_select 0, %s10, %s8
  %v12 = vstv %s6
  %13 = vst [vmem:[#allocation2] sm:$0x1] %v12
  $region1: #{tpu_custom_call.1} parent=0
    #allocation3 [shape = 'u8[512]{0}', space=vmem, size = 0x400, scoped, tag = 'output window, operand 0, single buffered']
    #allocation4 [shape = 's32[1]{0}', space=sflag, size = 0x4, scoped, tag = 'scoped memory for tpu_custom_call.1']
    %14 = vsyncpa [#allocation4], 0
    // Predicated region
    $region2: #{tpu_custom_call.1} parent=1 // pred_check
      _
    $region3: #{tpu_custom_call.1} parent=1 // pred_check_branch
      %16 = sbr.rel (0) target = $region5
    $region4: #{tpu_custom_call.1} parent=1 // pred_region
      _
    $region5: #{tpu_custom_call.1} parent=1 // pred_fallthru
      _
    // Predicated region
    $region6: #{tpu_custom_call.1} parent=1 // pred_check
      _
    $region7: #{tpu_custom_call.1} parent=1 // pred_check_branch
      %18 = sbr.rel (0) target = $region9
    $region8: #{tpu_custom_call.1} parent=1 // pred_region
      _
    $region9: #{tpu_custom_call.1} parent=1 // pred_fallthru
      _
    // Predicated region
    $region10: #{tpu_custom_call.1} parent=1 // pred_check
      _
    $region11: #{tpu_custom_call.1} parent=1 // pred_check_branch
      %20 = sbr.rel (0) target = $region13
    $region12: #{tpu_custom_call.1} parent=1 // pred_region
      _
    $region13: #{tpu_custom_call.1} parent=1 // pred_fallthru
      _
    // Predicated region
    $region14: #{tpu_custom_call.1} parent=1 // pred_check
      _
    $region15: #{tpu_custom_call.1} parent=1 // pred_check_branch
      %22 = sbr.rel (0) target = $region17
    $region16: #{tpu_custom_call.1} parent=1 // pred_region
      _
    $region17: #{tpu_custom_call.1} parent=1 // pred_fallthru
      _
    // Predicated region
    $region18: #{tpu_custom_call.1} parent=1 // pred_check
      _
    $region19: #{tpu_custom_call.1} parent=1 // pred_check_branch
      %24 = sbr.rel (0) target = $region21
    $region20: #{tpu_custom_call.1} parent=1 // pred_region
      _
    $region21: #{tpu_custom_call.1} parent=1 // pred_fallthru
      _
    // Predicated region
    $region22: #{tpu_custom_call.1} parent=1 // pred_check
      _
    $region23: #{tpu_custom_call.1} parent=1 // pred_check_branch
      %26 = sbr.rel (0) target = $region25
    $region24: #{tpu_custom_call.1} parent=1 // pred_region
      _
    $region25: #{tpu_custom_call.1} parent=1 // pred_fallthru
      _
    // Predicated region
    $region26: #{tpu_custom_call.1} parent=1 // pred_check
      _
    $region27: #{tpu_custom_call.1} parent=1 // pred_check_branch
      %28 = sbr.rel (0) target = $region29
    $region28: #{tpu_custom_call.1} parent=1 // pred_region
      _
    $region29: #{tpu_custom_call.1} parent=1 // pred_fallthru
      _
    %v29 = vld [vmem:[%s0] sm:$0xff]
    %v30 = vld [vmem:[%s1] sm:$0xff]
    %v31 = vld [vmem:[%s1 + $0x8] sm:$0xff]
    %v32 = vld [vmem:[%s1 + $0x10] sm:$0xff]
    %v33 = vld [vmem:[%s1 + $0x18] sm:$0xff]
    %v34 = vld [vmem:[%s2] sm:$0xff]
    %v35 = vld [vmem:[%s2 + $0x8] sm:$0xff]
    %v36 = vld [vmem:[%s2 + $0x10] sm:$0xff]
    %v37 = vld [vmem:[%s2 + $0x18] sm:$0xff]
    %39 = vset.pattern.permute.xlu0 0
    %40 = vperm.xlu0 %39, %v34
    %v41 = vpop.permute.xlu0 %40
    %44 = vset.pattern.permute.xlu0 0
    %45 = vperm.xlu0 %44, %v35
    %v46 = vpop.permute.xlu0 %45
    %49 = vset.pattern.permute.xlu0 0
    %50 = vperm.xlu0 %49, %v36
    %v51 = vpop.permute.xlu0 %50
    %54 = vset.pattern.permute.xlu0 0
    %55 = vperm.xlu0 %54, %v37
    %v56 = vpop.permute.xlu0 %55
    %vm58 = vcmask 130048
    %v60 = vsel %vm58, %v30, 0
    %v63 = vsel %vm58, %v31, 0
    %v66 = vsel %vm58, %v32, 0
    %v69 = vsel %vm58, %v33, 0
    %v72 = vsel %vm58, %v29, 0
    %74 = vmatprep.subr.mxu0 0.0
    %75 = vmatpush1.xpose.msra.mxu0 %v72
    %76 = vmatprep.subr.mxu0 0.0
    %77 = vmatpush1.xpose.msra.mxu0 0.0
    %78 = vmatprep.subr.mxu0 0.0
    %79 = vmatpush1.xpose.msra.mxu0 0.0
    %80 = vmatprep.subr.mxu0 0.0
    %81 = vmatpush1.xpose.msra.mxu0 0.0
    %82 = vmatprep.subr.mxu0 0.0
    %83 = vmatpush1.xpose.msra.mxu0 0.0
    %84 = vmatprep.subr.mxu0 0.0
    %85 = vmatpush1.xpose.msra.mxu0 0.0
    %86 = vmatprep.subr.mxu0 0.0
    %87 = vmatpush1.xpose.msra.mxu0 0.0
    %88 = vmatprep.subr.mxu0 0.0
    %89 = vmatpush1.xpose.msra.mxu0 0.0
    %90 = vmatprep.subr.mxu0 0.0
    %91 = vmatpush1.xpose.msra.mxu0 0.0
    %92 = vmatprep.subr.mxu0 0.0
    %93 = vmatpush1.xpose.msra.mxu0 0.0
    %94 = vmatprep.subr.mxu0 0.0
    %95 = vmatpush1.xpose.msra.mxu0 0.0
    %96 = vmatprep.subr.mxu0 0.0
    %97 = vmatpush1.xpose.msra.mxu0 0.0
    %98 = vmatprep.subr.mxu0 0.0
    %99 = vmatpush1.xpose.msra.mxu0 0.0
    %100 = vmatprep.subr.mxu0 0.0
    %101 = vmatpush1.xpose.msra.mxu0 0.0
    %102 = vmatprep.subr.mxu0 0.0
    %103 = vmatpush1.xpose.msra.mxu0 0.0
    %104 = vmatprep.subr.mxu0 0.0
    %105 = vmatpush1.xpose.msra.mxu0 0.0
    %106 = vmatprep.subr.mxu0 0.0
    %107 = vmatpush1.xpose.msra.mxu0 0.0
    %108 = vmatprep.subr.mxu0 0.0
    %109 = vmatpush1.xpose.msra.mxu0 0.0
    %110 = vmatprep.subr.mxu0 0.0
    %111 = vmatpush1.xpose.msra.mxu0 0.0
    %112 = vmatprep.subr.mxu0 0.0
    %113 = vmatpush1.xpose.msra.mxu0 0.0
    %114 = vmatprep.subr.mxu0 0.0
    %115 = vmatpush1.xpose.msra.mxu0 0.0
    %116 = vmatprep.subr.mxu0 0.0
    %117 = vmatpush1.xpose.msra.mxu0 0.0
    %118 = vmatprep.subr.mxu0 0.0
    %119 = vmatpush1.xpose.msra.mxu0 0.0
    %120 = vmatprep.subr.mxu0 0.0
    %121 = vmatpush1.xpose.msra.mxu0 0.0
    %122 = vmatprep.subr.mxu0 0.0
    %123 = vmatpush1.xpose.msra.mxu0 0.0
    %124 = vmatprep.subr.mxu0 0.0
    %125 = vmatpush1.xpose.msra.mxu0 0.0
    %126 = vmatprep.subr.mxu0 0.0
    %127 = vmatpush1.xpose.msra.mxu0 0.0
    %128 = vmatprep.subr.mxu0 0.0
    %129 = vmatpush1.xpose.msra.mxu0 0.0
    %130 = vmatprep.subr.mxu0 0.0
    %131 = vmatpush1.xpose.msra.mxu0 0.0
    %132 = vmatprep.subr.mxu0 0.0
    %133 = vmatpush1.xpose.msra.mxu0 0.0
    %134 = vmatprep.subr.mxu0 0.0
    %135 = vmatpush1.xpose.msra.mxu0 0.0
    %136 = vmatprep.subr.mxu0 0.0
    %137 = vmatpush1.xpose.msra.mxu0 0.0
    %138 = vmatprep.mubr.f32.mxu0 0.0
    %139 = vmatmul.mubr.f32.gmra.mrb[0].mxu0 %v60
    %v140 = vpop.f32.mrb[0].mxu0
    %v141 = vadd.f32 %v41, %v140
    %v142 = vpop.f32.mrb[0].mxu0
    %143 = vmatprep.mubr.f32.mxu0 0.0
    %144 = vmatmul.mubr.f32.gmra.mrb[0].mxu0 %v63
    %v145 = vpop.f32.mrb[0].mxu0
    %v146 = vadd.f32 %v46, %v145
    %v147 = vpop.f32.mrb[0].mxu0
    %148 = vmatprep.mubr.f32.mxu0 0.0
    %149 = vmatmul.mubr.f32.gmra.mrb[0].mxu0 %v66
    %v150 = vpop.f32.mrb[0].mxu0
    %v151 = vadd.f32 %v51, %v150
    %v152 = vpop.f32.mrb[0].mxu0
    %153 = vmatprep.mubr.f32.mxu0 0.0
    %154 = vmatmul.mubr.f32.gmra.mrb[0].mxu0 %v69
    %v155 = vpop.f32.mrb[0].mxu0
    %v156 = vadd.f32 %v56, %v155
    %v157 = vpop.f32.mrb[0].mxu0
    %158 = vdwg.mxu0
    %v159 = vtanh.pop %v141
    %v160 = vtanh.pop %v146
    %v161 = vtanh.pop %v151
    %v162 = vtanh.pop %v156
    %v163 = vld [vmem:[%s3] sm:$0xff]
    %v164 = vld [vmem:[%s3 + $0x8] sm:$0xff]
    %v165 = vld [vmem:[%s3 + $0x10] sm:$0xff]
    %v166 = vld [vmem:[%s3 + $0x18] sm:$0xff]
    %v167 = vld [vmem:[%s4] sm:$0xff]
    %v168 = vld [vmem:[%s4 + $0x8] sm:$0xff]
    %v169 = vld [vmem:[%s4 + $0x10] sm:$0xff]
    %v170 = vld [vmem:[%s4 + $0x18] sm:$0xff]
    %172 = vset.pattern.permute.xlu0 0
    %173 = vperm.xlu0 %172, %v167
    %v174 = vpop.permute.xlu0 %173
    %177 = vset.pattern.permute.xlu0 0
    %178 = vperm.xlu0 %177, %v168
    %v179 = vpop.permute.xlu0 %178
    %182 = vset.pattern.permute.xlu0 0
    %183 = vperm.xlu0 %182, %v169
    %v184 = vpop.permute.xlu0 %183
    %187 = vset.pattern.permute.xlu0 0
    %188 = vperm.xlu0 %187, %v170
    %v189 = vpop.permute.xlu0 %188
    %vm191 = vcmask 261120
    %v193 = vsel %vm191, %v163, 0
    %v196 = vsel %vm191, %v164, 0
    %v199 = vsel %vm191, %v165, 0
    %v202 = vsel %vm191, %v166, 0
    %204 = vmatprep.subr.mxu0 0.0
    %205 = vmatpush1.msra.mxu0 %v159
    %206 = vmatprep.subr.mxu0 0.0
    %207 = vmatpush1.msra.mxu0 %v160
    %208 = vmatprep.subr.mxu0 0.0
    %209 = vmatpush1.msra.mxu0 %v161
    %210 = vmatprep.subr.mxu0 0.0
    %211 = vmatpush1.msra.mxu0 %v162
    %212 = vmatprep.subr.mxu0 0.0
    %213 = vmatpush1.msra.mxu0 0.0
    %214 = vmatprep.subr.mxu0 0.0
    %215 = vmatpush1.msra.mxu0 0.0
    %216 = vmatprep.subr.mxu0 0.0
    %217 = vmatpush1.msra.mxu0 0.0
    %218 = vmatprep.subr.mxu0 0.0
    %219 = vmatpush1.msra.mxu0 0.0
    %220 = vmatprep.subr.mxu0 0.0
    %221 = vmatpush1.msra.mxu0 0.0
    %222 = vmatprep.subr.mxu0 0.0
    %223 = vmatpush1.msra.mxu0 0.0
    %224 = vmatprep.subr.mxu0 0.0
    %225 = vmatpush1.msra.mxu0 0.0
    %226 = vmatprep.subr.mxu0 0.0
    %227 = vmatpush1.msra.mxu0 0.0
    %228 = vmatprep.subr.mxu0 0.0
    %229 = vmatpush1.msra.mxu0 0.0
    %230 = vmatprep.subr.mxu0 0.0
    %231 = vmatpush1.msra.mxu0 0.0
    %232 = vmatprep.subr.mxu0 0.0
    %233 = vmatpush1.msra.mxu0 0.0
    %234 = vmatprep.subr.mxu0 0.0
    %235 = vmatpush1.msra.mxu0 0.0
    %236 = vmatprep.subr.mxu0 0.0
    %237 = vmatpush1.msra.mxu0 0.0
    %238 = vmatprep.subr.mxu0 0.0
    %239 = vmatpush1.msra.mxu0 0.0
    %240 = vmatprep.subr.mxu0 0.0
    %241 = vmatpush1.msra.mxu0 0.0
    %242 = vmatprep.subr.mxu0 0.0
    %243 = vmatpush1.msra.mxu0 0.0
    %244 = vmatprep.subr.mxu0 0.0
    %245 = vmatpush1.msra.mxu0 0.0
    %246 = vmatprep.subr.mxu0 0.0
    %247 = vmatpush1.msra.mxu0 0.0
    %248 = vmatprep.subr.mxu0 0.0
    %249 = vmatpush1.msra.mxu0 0.0
    %250 = vmatprep.subr.mxu0 0.0
    %251 = vmatpush1.msra.mxu0 0.0
    %252 = vmatprep.subr.mxu0 0.0
    %253 = vmatpush1.msra.mxu0 0.0
    %254 = vmatprep.subr.mxu0 0.0
    %255 = vmatpush1.msra.mxu0 0.0
    %256 = vmatprep.subr.mxu0 0.0
    %257 = vmatpush1.msra.mxu0 0.0
    %258 = vmatprep.subr.mxu0 0.0
    %259 = vmatpush1.msra.mxu0 0.0
    %260 = vmatprep.subr.mxu0 0.0
    %261 = vmatpush1.msra.mxu0 0.0
    %262 = vmatprep.subr.mxu0 0.0
    %263 = vmatpush1.msra.mxu0 0.0
    %264 = vmatprep.subr.mxu0 0.0
    %265 = vmatpush1.msra.mxu0 0.0
    %266 = vmatprep.subr.mxu0 0.0
    %267 = vmatpush1.msra.mxu0 0.0
    %268 = vmatprep.mubr.f32.mxu0 0.0
    %269 = vmatmul.mubr.f32.gmra.mrb[0].mxu0 %v193
    %v270 = vpop.f32.mrb[0].mxu0
    %v271 = vadd.f32 %v174, %v270
    %v272 = vpop.f32.mrb[0].mxu0
    %273 = vmatprep.mubr.f32.mxu0 0.0
    %274 = vmatmul.mubr.f32.gmra.mrb[0].mxu0 %v196
    %v275 = vpop.f32.mrb[0].mxu0
    %v276 = vadd.f32 %v179, %v275
    %v277 = vpop.f32.mrb[0].mxu0
    %278 = vmatprep.mubr.f32.mxu0 0.0
    %279 = vmatmul.mubr.f32.gmra.mrb[0].mxu0 %v199
    %v280 = vpop.f32.mrb[0].mxu0
    %v281 = vadd.f32 %v184, %v280
    %v282 = vpop.f32.mrb[0].mxu0
    %283 = vmatprep.mubr.f32.mxu0 0.0
    %284 = vmatmul.mubr.f32.gmra.mrb[0].mxu0 %v202
    %v285 = vpop.f32.mrb[0].mxu0
    %v286 = vadd.f32 %v189, %v285
    %v287 = vpop.f32.mrb[0].mxu0
    %288 = vdwg.mxu0
    %v289 = vtanh.pop %v271
    %v290 = vtanh.pop %v276
    %v291 = vtanh.pop %v281
    %v292 = vtanh.pop %v286
    %v293 = vld [vmem:[%s5] sm:$0xff]
    %v294 = vld [vmem:[%s5 + $0x8] sm:$0xff]
    %v295 = vld [vmem:[%s5 + $0x10] sm:$0xff]
    %v296 = vld [vmem:[%s5 + $0x18] sm:$0xff]
    %298 = vset.pattern.permute.xlu0 0
    %299 = vperm.xlu0 %298, %v293
    %v300 = vpop.permute.xlu0 %299
    %303 = vset.pattern.permute.xlu0 0
    %304 = vperm.xlu0 %303, %v294
    %v305 = vpop.permute.xlu0 %304
    %308 = vset.pattern.permute.xlu0 0
    %309 = vperm.xlu0 %308, %v295
    %v310 = vpop.permute.xlu0 %309
    %313 = vset.pattern.permute.xlu0 0
    %314 = vperm.xlu0 %313, %v296
    %v315 = vpop.permute.xlu0 %314
    %v317 = vmul.f32 %v300, %v289
    %v318 = vmul.f32 %v305, %v290
    %v319 = vmul.f32 %v310, %v291
    %v320 = vmul.f32 %v315, %v292
    %vm321 = vcmask 64512
    %v322 = vsel %vm321, %v317, 0.0
    %v323 = vsel %vm321, %v318, 0.0
    %v324 = vadd.f32 %v322, %v323
    %v325 = vsel %vm321, %v319, 0.0
    %v326 = vadd.f32 %v324, %v325
    %v327 = vsel %vm321, %v320, 0.0
    %v328 = vadd.f32 %v326, %v327
    %v329 = vrot.slane %v328, 4
    %v330 = vadd.f32 %v328, %v329
    %v331 = vrot.slane %v330, 2
    %v332 = vadd.f32 %v330, %v331
    %v333 = vrot.slane %v332, 1
    %v334 = vadd.f32 %v332, %v333
    %v335 = vld [vmem:[#allocation2] sm:$0x1]
    %337 = vset.pattern.permute.xlu0 0
    %338 = vperm.xlu0 %337, %v335
    %v339 = vpop.permute.xlu0 %338
    %v341 = vlaneseq
    %v342 = vshrl.u32 %v341, 7
    %v343 = vsub.s32 0, %v342
    %v344 = vrot.slane %v339, %v343
    %v345 = vadd.f32 %v334, %v344
    %vm346 = vcmask 57344
    %347 = vst.msk [vmem:[#allocation3] sm:$0x1] %vm346, %v345
    // Predicated region
    $region30: #{tpu_custom_call.1} parent=1 // pred_check
      _
    $region31: #{tpu_custom_call.1} parent=1 // pred_check_branch
      %349 = sbr.rel (0) target = $region33
    $region32: #{tpu_custom_call.1} parent=1 // pred_region
      %s351 = ssub.s32 16, 16
      %352 = vsyncadd [#allocation4], %s351
      %s354 = sshll.u32 [#allocation3], 4
      %s355 = int_to_ptr.vmem [resolvable:$true] %s354
      %357 = dma.vmem_to_hbm [thread:$0]  %s355, 16, %s7, [#allocation4]
    $region33: #{tpu_custom_call.1} parent=1 // pred_fallthru
      _
    // Predicated region
    $region34: #{tpu_custom_call.1} parent=1 // pred_check
      _
    $region35: #{tpu_custom_call.1} parent=1 // pred_check_branch
      %359 = sbr.rel (0) target = $region37
    $region36: #{tpu_custom_call.1} parent=1 // pred_region
      %360 = dma.done [#allocation4], 16
    $region37: #{tpu_custom_call.1} parent=1 // pred_fallthru
      _
    %361 = vsyncpa [#allocation4], 1

</llo_original>
